<compile_context>
chip_gen: v7x
topology: tpu7x:2x2x1
jax: 0.10.0
libtpu: 0.0.40
codegen_flags: <defaults>
</compile_context>

<pallas_src>
import math

import jax
import jax.numpy as jnp
from jax.experimental import pallas as pl
from jax.experimental.pallas import tpu as pltpu


def _round_up(x, m):
    return ((x + m - 1) // m) * m


def _cdiv(a, b):
    return -(-a // b)


def _vmem_capacity_bytes():
    """Physical per-core VMEM (generation aware); conservative fallback."""
    try:
        info = pltpu.get_tpu_info()
        cap = getattr(info, "vmem_capacity_bytes", None)
        if cap:
            return int(cap)
    except Exception:
        pass
    return 64 * 1024 * 1024  # v7x size -> safe on every generation


def _largest_aligned_divisor(total, max_tile, align=128):
    """Largest multiple of `align` that divides `total` (a multiple of align)
    and is <= max_tile. Falls back to `align`."""
    m = total // align
    best = 1
    d = 1
    while d * d <= m:
        if m % d == 0:
            for c in (d, m // d):
                if c * align <= max_tile and c > best:
                    best = c
        d += 1
    return best * align


# ---------------------------------------------------------------------------
# Kernels
# ---------------------------------------------------------------------------
# Path A: weight panel fully resident in VMEM; one MXU dot per row tile.
def _wres_bias_kernel(x_ref, w_ref, b_ref, o_ref):
    acc = jnp.dot(x_ref[...], w_ref[...], preferred_element_type=jnp.float32)
    o_ref[...] = (acc + b_ref[...].astype(jnp.float32)).astype(o_ref.dtype)


def _wres_nobias_kernel(x_ref, w_ref, o_ref):
    o_ref[...] = jnp.dot(x_ref[...], w_ref[...],
                         preferred_element_type=jnp.float32).astype(o_ref.dtype)


# Path B: 3-D (rows, out, K) reduction grid with f32 accumulator scratch.
def _tiled_bias_kernel(x_ref, w_ref, b_ref, o_ref, acc_ref):
    k = pl.program_id(2)

    @pl.when(k == 0)
    def _():
        acc_ref[...] = jnp.zeros_like(acc_ref)

    acc_ref[...] += jnp.dot(x_ref[...], w_ref[...],
                            preferred_element_type=jnp.float32)

    @pl.when(k == pl.num_programs(2) - 1)
    def _():
        o_ref[...] = (acc_ref[...] + b_ref[...].astype(jnp.float32)).astype(o_ref.dtype)


def _tiled_nobias_kernel(x_ref, w_ref, o_ref, acc_ref):
    k = pl.program_id(2)

    @pl.when(k == 0)
    def _():
        acc_ref[...] = jnp.zeros_like(acc_ref)

    acc_ref[...] += jnp.dot(x_ref[...], w_ref[...],
                            preferred_element_type=jnp.float32)

    @pl.when(k == pl.num_programs(2) - 1)
    def _():
        o_ref[...] = acc_ref[...].astype(o_ref.dtype)


# ---------------------------------------------------------------------------
# Wrapper
# ---------------------------------------------------------------------------
def mlp_layer_forward(x, wt, bias=None, *, out_channels=None,
                      tile_n_max=512, tile_out_max=512, tile_k_max=None,
                      compute_dtype=None, out_dtype=None, weight_resident=None):
    """Pallas equivalent of torch.nn.Linear(in_channels, out_channels)(x).

    x:    [N, in_channels]
    wt:   [in_channels(+pad), out_channels(+pad)] -- weight pre-transposed (and
          ideally pre-padded to 128 multiples) once at init.
    bias: [out_channels] / [1, out_channels(+pad)] or None (padded cols are 0).
    out_channels: logical output width (defaults to wt.shape[1]).
    compute_dtype: e.g. jnp.bfloat16 to feed the MXU bf16 (f32 accumulation);
                   None keeps x.dtype so f32 semantics match torch exactly.
    weight_resident: None=auto, False=force the tiled fallback path.
    """
    n, in_c = x.shape
    k_w, out_w = wt.shape
    assert in_c <= k_w, (in_c, k_w)
    out_channels = out_w if out_channels is None else out_channels

    orig_dtype = x.dtype
    out_dtype = out_dtype or orig_dtype
    if compute_dtype is not None:
        x = x.astype(compute_dtype)
        wt = wt.astype(compute_dtype)

    itemsize = jnp.dtype(x.dtype).itemsize
    out_itemsize = jnp.dtype(out_dtype).itemsize
    row_mult = 16 if itemsize == 2 else 8          # sublane granularity
    if tile_k_max is None:
        tile_k_max = 2048 if itemsize == 2 else 1024

    # Lane-align the weight panel (no-op when pre-padded in init_mlp_layer).
    k_pad = _round_up(k_w, 128)
    out_pad = _round_up(out_w, 128)
    if (k_pad, out_pad) != (k_w, out_w):
        wt = jnp.pad(wt, ((0, k_pad - k_w), (0, out_pad - out_w)))

    b2d = None
    bias_itemsize = 0
    if bias is not None:
        b2d = bias.reshape(1, -1)
        if b2d.shape[1] != out_pad:
            b2d = jnp.pad(b2d, ((0, 0), (0, out_pad - b2d.shape[1])))
        bias_itemsize = jnp.dtype(b2d.dtype).itemsize

    cap = _vmem_capacity_bytes()
    budget = int(cap * 0.7)

    # --- Path selection: weight-resident single-pass when it fits VMEM. -----
    # Conservatively count 2 buffers for every input (BlockSpec double-buffer).
    fixed = 2 * k_pad * out_pad * itemsize
    if b2d is not None:
        fixed += 2 * out_pad * bias_itemsize
    per_row = 2 * (k_pad * itemsize + out_pad * out_itemsize)
    fits_resident = fixed + per_row * row_mult <= budget
    use_resident = fits_resident if weight_resident is None else (weight_resident and fits_resident)

    if use_resident:
        # ---------------- Path A: weight resident, stream x exactly once ----
        max_rows_fit = (budget - fixed) // per_row
        tile_n_cap = max(row_mult, min(tile_n_max, (max_rows_fit // row_mult) * row_mult))
        num_i = max(1, _cdiv(n, tile_n_cap))
        if num_i == 1 and n >= 2 * row_mult:
            num_i = 2      # >=2 blocks on the parallel axis -> v7x 2-TC sharding
        tile_n = _round_up(_cdiv(n, num_i), row_mult)
        n_p = num_i * tile_n

        if (n_p, k_pad) != (n, in_c):
            x = jnp.pad(x, ((0, n_p - n), (0, k_pad - in_c)))

        grid = (num_i,)
        in_specs = [pl.BlockSpec((tile_n, k_pad), lambda i: (i, 0)),
                    pl.BlockSpec((k_pad, out_pad), lambda i: (0, 0))]  # constant -> DMA'd once
        inputs = [x, wt]
        if b2d is not None:
            in_specs.append(pl.BlockSpec((1, out_pad), lambda i: (0, 0)))
            inputs.append(b2d)
            kernel = _wres_bias_kernel
        else:
            kernel = _wres_nobias_kernel
        out_specs = pl.BlockSpec((tile_n, out_pad), lambda i: (i, 0))
        scratch_shapes = []
        dim_sem = ("parallel",)

        footprint = fixed + per_row * tile_n
        bytes_accessed = (n_p * k_pad * itemsize + k_pad * out_pad * itemsize
                          + n_p * out_pad * out_itemsize
                          + (out_pad * bias_itemsize if b2d is not None else 0))
    else:
        # ---------------- Path B: tiled 3-D reduction grid -------------------
        tile_out = _largest_aligned_divisor(out_pad, tile_out_max)
        tile_k = _largest_aligned_divisor(k_pad, tile_k_max)
        num_i = max(1, _cdiv(n, tile_n_max))
        tile_n = _round_up(_cdiv(n, num_i), row_mult)
        n_p = num_i * tile_n

        def _footprint(tn, tk, to):
            f = 2 * (tn * tk + tk * to) * itemsize          # double-buffered x / w tiles
            f += 2 * tn * to * out_itemsize + tn * to * 4   # out tiles + f32 accumulator
            if b2d is not None:
                f += 2 * to * bias_itemsize
            return f

        while _footprint(tile_n, tile_k, tile_out) > budget and tile_k > 128:
            tile_k = _largest_aligned_divisor(k_pad, tile_k // 2)
        while _footprint(tile_n, tile_k, tile_out) > budget and tile_out > 128:
            tile_out = _largest_aligned_divisor(out_pad, tile_out // 2)
        while _footprint(tile_n, tile_k, tile_out) > budget and tile_n > row_mult:
            tile_n = max(row_mult, _round_up(tile_n // 2, row_mult))
            num_i = _cdiv(n, tile_n)
            n_p = num_i * tile_n
        footprint = _footprint(tile_n, tile_k, tile_out)

        if (n_p, k_pad) != (n, in_c):
            x = jnp.pad(x, ((0, n_p - n), (0, k_pad - in_c)))

        num_j = out_pad // tile_out
        num_k = k_pad // tile_k
        grid = (num_i, num_j, num_k)
        in_specs = [pl.BlockSpec((tile_n, tile_k), lambda i, j, k: (i, k)),
                    pl.BlockSpec((tile_k, tile_out), lambda i, j, k: (k, j))]
        inputs = [x, wt]
        if b2d is not None:
            in_specs.append(pl.BlockSpec((1, tile_out), lambda i, j, k: (0, j)))
            inputs.append(b2d)
            kernel = _tiled_bias_kernel
        else:
            kernel = _tiled_nobias_kernel
        out_specs = pl.BlockSpec((tile_n, tile_out), lambda i, j, k: (i, j))
        scratch_shapes = [pltpu.VMEM((tile_n, tile_out), jnp.float32)]
        dim_sem = ("parallel", "parallel", "arbitrary")

        # Honest traffic: x re-streamed per out tile, weight per row tile.
        bytes_accessed = (num_j * n_p * k_pad * itemsize
                          + num_i * k_pad * out_pad * itemsize
                          + n_p * out_pad * out_itemsize
                          + (num_i * out_pad * bias_itemsize if b2d is not None else 0))

    flops = 2 * n_p * k_pad * out_pad
    cost = pl.CostEstimate(flops=flops, transcendentals=0,
                           bytes_accessed=int(bytes_accessed))
    vmem_limit = int(min(cap - 2 * 1024 * 1024,
                         max(32 * 1024 * 1024, int(footprint * 1.3))))

    out = pl.pallas_call(
        kernel,
        out_shape=jax.ShapeDtypeStruct((n_p, out_pad), out_dtype),
        grid_spec=pltpu.PrefetchScalarGridSpec(
            num_scalar_prefetch=0,
            grid=grid,
            in_specs=in_specs,
            out_specs=out_specs,
            scratch_shapes=scratch_shapes,
        ),
        compiler_params=pltpu.CompilerParams(
            dimension_semantics=dim_sem,
            vmem_limit_bytes=vmem_limit,
        ),
        cost_estimate=cost,
    )(*inputs)

    if (n_p, out_pad) != (n, out_channels):
        out = out[:n, :out_channels]
    return out


# ---------------------------------------------------------------------------
# Parameter init matching the PyTorch module (glorot weight, zero bias), with
# the weight transpose AND lane-alignment padding hoisted out of the forward.
# ---------------------------------------------------------------------------
def glorot_uniform(key, shape, dtype=jnp.float32):
    # torch_geometric glorot: U(-a, a), a = sqrt(6 / (fan_in + fan_out)).
    fan_out, fan_in = shape
    a = math.sqrt(6.0 / (fan_in + fan_out))
    return jax.random.uniform(key, shape, dtype=dtype, minval=-a, maxval=a)


def init_mlp_layer(key, in_channels, out_channels, bias=True, dtype=jnp.float32):
    w = glorot_uniform(key, (out_channels, in_channels), dtype)  # torch layout
    wt = jnp.asarray(w.T)                       # MXU RHS layout [in_c, out_c]
    k_pad = _round_up(in_channels, 128)
    out_pad = _round_up(out_channels, 128)
    wt = jnp.pad(wt, ((0, k_pad - in_channels), (0, out_pad - out_channels)))
    b = jnp.zeros((1, out_pad), dtype=dtype) if bias else None
    return {"wt": wt, "b": b,
            "in_channels": in_channels, "out_channels": out_channels}


if __name__ == "__main__":
    key = jax.random.PRNGKey(0)
    k_x, k_w, k_x2, k_w2, k_x3, k_w3 = jax.random.split(key, 6)

    # 1) Tiny case, bias, f32 (exact semantics of torch.nn.Linear).
    N, in_c, out_c = 8, 32, 16
    x = jax.random.normal(k_x, (N, in_c), dtype=jnp.float32)
    p = init_mlp_layer(k_w, in_c, out_c, bias=True)
    out = jax.block_until_ready(
        mlp_layer_forward(x, p["wt"], p["b"], out_channels=p["out_channels"]))
    ref = (jnp.dot(x, p["wt"][:in_c, :out_c], precision=jax.lax.Precision.HIGHEST)
           + p["b"][0, :out_c])
    assert out.shape == (N, out_c)
    assert jnp.allclose(out, ref, atol=1e-5, rtol=1e-5)

    # 2) Ragged shape, no bias -> weight-resident single-pass path, 2 row tiles.
    N2, in_c2, out_c2 = 300, 256, 384
    x2 = jax.random.normal(k_x2, (N2, in_c2), dtype=jnp.float32)
    p2 = init_mlp_layer(k_w2, in_c2, out_c2, bias=False)
    out2 = jax.block_until_ready(
        mlp_layer_forward(x2, p2["wt"], None, out_channels=out_c2))
    ref2 = jnp.dot(x2, p2["wt"][:in_c2, :out_c2],
                   precision=jax.lax.Precision.HIGHEST)
    assert out2.shape == (N2, out_c2)
    assert jnp.allclose(out2, ref2, atol=1e-4, rtol=1e-4)

    # 3) bf16 MXU inputs (recommended fast path), f32 accumulation + f32 output.
    p3 = init_mlp_layer(k_w3, in_c2, out_c2, bias=True, dtype=jnp.bfloat16)
    x3 = jax.random.normal(k_x3, (N2, in_c2), dtype=jnp.bfloat16)
    out3 = jax.block_until_ready(
        mlp_layer_forward(x3, p3["wt"], p3["b"], out_channels=out_c2,
                          out_dtype=jnp.float32))
    ref3 = (jnp.dot(x3.astype(jnp.float32),
                    p3["wt"][:in_c2, :out_c2].astype(jnp.float32),
                    precision=jax.lax.Precision.HIGHEST)
            + p3["b"][0, :out_c2].astype(jnp.float32))
    assert out3.shape == (N2, out_c2)
    assert jnp.allclose(out3, ref3, atol=2e-2, rtol=2e-2)

    # 4) Force the tiled 3-D reduction fallback (exercises the big-weight path).
    out4 = jax.block_until_ready(
        mlp_layer_forward(x2, p2["wt"], None, out_channels=out_c2,
                          weight_resident=False,
                          tile_n_max=128, tile_out_max=128, tile_k_max=128))
    assert jnp.allclose(out4, ref2, atol=1e-4, rtol=1e-4)

    print("KERNEL_OK")
</pallas_src>

<mosaic_0001>
module attributes {stable_mosaic.version = 11 : i64} {
  func.func @_wres_bias_kernel(%arg0: i32, %arg1: memref<8x128xf32, #tpu.memory_space<vmem>>, %arg2: memref<128x128xf32, #tpu.memory_space<vmem>>, %arg3: memref<1x128xf32, #tpu.memory_space<vmem>>, %arg4: memref<8x128xf32, #tpu.memory_space<vmem>>) attributes {dimension_semantics = [#tpu.dimension_semantics<parallel>], iteration_bounds = array<i64: 1>, scalar_prefetch = 0 : i64, scratch_operands = 0 : i64, tpu.core_type = #tpu.core_type<tc>, window_params = [{transform_indices = @transform_0, window_bounds = array<i64: 8, 128>}, {pipeline_mode = #tpu.pipeline_mode<synchronous>, transform_indices = @transform_1, window_bounds = array<i64: 128, 128>}, {pipeline_mode = #tpu.pipeline_mode<synchronous>, transform_indices = @transform_2, window_bounds = array<i64: 1, 128>}, {transform_indices = @transform_3, window_bounds = array<i64: 8, 128>}]} {
    %c0 = arith.constant 0 : index
    %c0_0 = arith.constant 0 : index
    %0 = vector.load %arg1[%c0, %c0_0] : memref<8x128xf32, #tpu.memory_space<vmem>>, vector<8x128xf32>
    %c0_1 = arith.constant 0 : index
    %c0_2 = arith.constant 0 : index
    %1 = vector.load %arg2[%c0_1, %c0_2] : memref<128x128xf32, #tpu.memory_space<vmem>>, vector<128x128xf32>
    %cst = arith.constant dense<0.000000e+00> : vector<8x128xf32>
    %2 = tpu.matmul %0, %1, %cst {dimension_numbers = #tpu.dot_dimension_numbers<[1], [0], [0], [1], [0, 0, 1, 1], [], []>} : vector<8x128xf32>, vector<128x128xf32>, vector<8x128xf32> -> vector<8x128xf32>
    %c0_3 = arith.constant 0 : index
    %c0_4 = arith.constant 0 : index
    %3 = vector.load %arg3[%c0_3, %c0_4] : memref<1x128xf32, #tpu.memory_space<vmem>>, vector<1x128xf32>
    %4 = vector.broadcast %3 : vector<1x128xf32> to vector<8x128xf32>
    %5 = arith.addf %2, %4 : vector<8x128xf32>
    %c0_5 = arith.constant 0 : index
    %c0_6 = arith.constant 0 : index
    %6 = vector.load %arg4[%c0_5, %c0_6] : memref<8x128xf32, #tpu.memory_space<vmem>>, vector<8x128xf32>
    tpu.vector_store %arg4[%c0_5, %c0_6], %5 {strides = array<i32>} : memref<8x128xf32, #tpu.memory_space<vmem>>, vector<8x128xf32>,
    return
  }
  func.func @transform_0(%arg0: i32) -> (i32, i32) {
    %c0_i32 = arith.constant 0 : i32
    %c0_i32_0 = arith.constant 0 : i32
    return %arg0, %c0_i32 : i32, i32
  }
  func.func @transform_1(%arg0: i32) -> (i32, i32) {
    %c0_i32 = arith.constant 0 : i32
    %c0_i32_0 = arith.constant 0 : i32
    %c0_i32_1 = arith.constant 0 : i32
    return %c0_i32, %c0_i32_0 : i32, i32
  }
  func.func @transform_2(%arg0: i32) -> (i32, i32) {
    %c0_i32 = arith.constant 0 : i32
    %c0_i32_0 = arith.constant 0 : i32
    %c0_i32_1 = arith.constant 0 : i32
    return %c0_i32, %c0_i32_0 : i32, i32
  }
  func.func @transform_3(%arg0: i32) -> (i32, i32) {
    %c0_i32 = arith.constant 0 : i32
    %c0_i32_0 = arith.constant 0 : i32
    return %arg0, %c0_i32 : i32, i32
  }
}

</mosaic_0001>

<llo_original>
// kernel: tpu_custom_call.1
$region0: #{tpu_custom_call.1}
  #allocation0 [shape = 'u32[]', space=smem, size = 0x4, offset = 0x4, fixed_abs, tag = 'smem constant byte address 0x4 - core index']
  #allocation1 [shape = 'u32[144,128]{1,0:T(1,128)}', space=vmem, size = 0x12000, scoped, tag = 'internal scratch']
  %s0 = inlined_call_operand.hbm [shape: f32[8,128], index: 0, kind: input, shape index: {}]
  %s1 = inlined_call_operand.hbm [shape: f32[128,128], index: 1, kind: input, shape index: {}]
  %s2 = inlined_call_operand.vmem [shape: f32[1,128], index: 2, kind: input, shape index: {}]
  %s3 = inlined_call_operand.hbm [shape: f32[8,128], index: 3, kind: output, shape index: {}]
  %s4 = sld [smem:[#allocation0]]
  $region30: #{tpu_custom_call.1} parent=0
    _
  %s6 = ssub.s32 1, %s4
  %s7 = scalar_select 0, %s6, %s4
  $region1: #{tpu_custom_call.1} parent=0
    #allocation2 [shape = 'u8[4096]{0}', space=vmem, size = 0x1000, scoped, tag = 'input window, operand 0, single buffered']
    #allocation3 [shape = 's32[1]{0}', space=sflag, size = 0x4, scoped, tag = 'scoped memory for tpu_custom_call.1']
    #allocation4 [shape = 's32[1]{0}', space=sflag, size = 0x4, scoped, tag = 'scoped memory for tpu_custom_call.1']
    #allocation5 [shape = 'u8[65536]{0}', space=vmem, size = 0x10000, scoped, tag = 'input window, operand 1, single buffered']
    #allocation6 [shape = 's32[1]{0}', space=sflag, size = 0x4, scoped, tag = 'scoped memory for tpu_custom_call.1']
    #allocation7 [shape = 'u8[4096]{0}', space=vmem, size = 0x1000, scoped, tag = 'output window, operand 0, single buffered']
    %8 = vsyncpa [#allocation3], 0
    %9 = vsyncpa [#allocation6], 0
    %10 = vsyncpa [#allocation4], 0
    // Predicated region
    $region2: #{tpu_custom_call.1} parent=1 // pred_check
      _
    $region3: #{tpu_custom_call.1} parent=1 // pred_check_branch
      %12 = sbr.rel (0) target = $region5
    $region4: #{tpu_custom_call.1} parent=1 // pred_region
      %s14 = ssub.s32 128, 128
      %15 = vsyncadd [#allocation3], %s14
      %s17 = sshll.u32 [#allocation2], 4
      %s18 = int_to_ptr.vmem [resolvable:$true] %s17
      %20 = dma.hbm_to_vmem [thread:$0]  %s0, 128, %s18, [#allocation3]
    $region5: #{tpu_custom_call.1} parent=1 // pred_fallthru
      _
    // Predicated region
    $region6: #{tpu_custom_call.1} parent=1 // pred_check
      _
    $region7: #{tpu_custom_call.1} parent=1 // pred_check_branch
      %22 = sbr.rel (0) target = $region9
    $region8: #{tpu_custom_call.1} parent=1 // pred_region
      %s24 = ssub.s32 2048, 2048
      %25 = vsyncadd [#allocation6], %s24
      %s26 = sshll.u32 [#allocation5], 4
      %s27 = int_to_ptr.vmem [resolvable:$true] %s26
      %32 = dma.hbm_to_vmem [thread:$0]  %s1, 2048, %s27, [#allocation6], 128, 128, 8
    $region9: #{tpu_custom_call.1} parent=1 // pred_fallthru
      _
    // Predicated region
    $region10: #{tpu_custom_call.1} parent=1 // pred_check
      _
    $region11: #{tpu_custom_call.1} parent=1 // pred_check_branch
      %34 = sbr.rel (0) target = $region13
    $region12: #{tpu_custom_call.1} parent=1 // pred_region
      _
    $region13: #{tpu_custom_call.1} parent=1 // pred_fallthru
      _
    // Predicated region
    $region14: #{tpu_custom_call.1} parent=1 // pred_check
      _
    $region15: #{tpu_custom_call.1} parent=1 // pred_check_branch
      %36 = sbr.rel (0) target = $region17
    $region16: #{tpu_custom_call.1} parent=1 // pred_region
      %37 = dma.done [#allocation3], 128
    $region17: #{tpu_custom_call.1} parent=1 // pred_fallthru
      _
    // Predicated region
    $region18: #{tpu_custom_call.1} parent=1 // pred_check
      _
    $region19: #{tpu_custom_call.1} parent=1 // pred_check_branch
      %39 = sbr.rel (0) target = $region21
    $region20: #{tpu_custom_call.1} parent=1 // pred_region
      %40 = dma.done [#allocation6], 2048
    $region21: #{tpu_custom_call.1} parent=1 // pred_fallthru
      _
    %v41 = vld [vmem:[#allocation2] sm:$0xff]
    %v42 = vld [vmem:[#allocation5] sm:$0xff]
    %v43 = vld [vmem:[#allocation5 + $0x8] sm:$0xff]
    %v44 = vld [vmem:[#allocation5 + $0x10] sm:$0xff]
    %v45 = vld [vmem:[#allocation5 + $0x18] sm:$0xff]
    %v46 = vld [vmem:[#allocation5 + $0x20] sm:$0xff]
    %v47 = vld [vmem:[#allocation5 + $0x28] sm:$0xff]
    %v48 = vld [vmem:[#allocation5 + $0x30] sm:$0xff]
    %v49 = vld [vmem:[#allocation5 + $0x38] sm:$0xff]
    %v50 = vld [vmem:[#allocation5 + $0x40] sm:$0xff]
    %v51 = vld [vmem:[#allocation5 + $0x48] sm:$0xff]
    %v52 = vld [vmem:[#allocation5 + $0x50] sm:$0xff]
    %v53 = vld [vmem:[#allocation5 + $0x58] sm:$0xff]
    %v54 = vld [vmem:[#allocation5 + $0x60] sm:$0xff]
    %v55 = vld [vmem:[#allocation5 + $0x68] sm:$0xff]
    %v56 = vld [vmem:[#allocation5 + $0x70] sm:$0xff]
    %v57 = vld [vmem:[#allocation5 + $0x78] sm:$0xff]
    %v58 = vld [vmem:[%s2] sm:$0x1]
    %v60 = vlaneseq
    %v61 = vshrl.u32 %v60, 7
    %v62 = vsub.s32 0, %v61
    %v63 = vrot.slane %v58, %v62
    %65 = vmatprep.subr.mxu0 0.0
    %66 = vmatpush1.msra.mxu0 %v42
    %67 = vmatprep.subr.mxu0 0.0
    %68 = vmatpush1.msra.mxu0 %v43
    %69 = vmatprep.subr.mxu0 0.0
    %70 = vmatpush1.msra.mxu0 %v44
    %71 = vmatprep.subr.mxu0 0.0
    %72 = vmatpush1.msra.mxu0 %v45
    %73 = vmatprep.subr.mxu0 0.0
    %74 = vmatpush1.msra.mxu0 %v46
    %75 = vmatprep.subr.mxu0 0.0
    %76 = vmatpush1.msra.mxu0 %v47
    %77 = vmatprep.subr.mxu0 0.0
    %78 = vmatpush1.msra.mxu0 %v48
    %79 = vmatprep.subr.mxu0 0.0
    %80 = vmatpush1.msra.mxu0 %v49
    %81 = vmatprep.subr.mxu0 0.0
    %82 = vmatpush1.msra.mxu0 %v50
    %83 = vmatprep.subr.mxu0 0.0
    %84 = vmatpush1.msra.mxu0 %v51
    %85 = vmatprep.subr.mxu0 0.0
    %86 = vmatpush1.msra.mxu0 %v52
    %87 = vmatprep.subr.mxu0 0.0
    %88 = vmatpush1.msra.mxu0 %v53
    %89 = vmatprep.subr.mxu0 0.0
    %90 = vmatpush1.msra.mxu0 %v54
    %91 = vmatprep.subr.mxu0 0.0
    %92 = vmatpush1.msra.mxu0 %v55
    %93 = vmatprep.subr.mxu0 0.0
    %94 = vmatpush1.msra.mxu0 %v56
    %95 = vmatprep.subr.mxu0 0.0
    %96 = vmatpush1.msra.mxu0 %v57
    %97 = vmatprep.subr.mxu0 0.0
    %98 = vmatpush1.msra.mxu0 0.0
    %99 = vmatprep.subr.mxu0 0.0
    %100 = vmatpush1.msra.mxu0 0.0
    %101 = vmatprep.subr.mxu0 0.0
    %102 = vmatpush1.msra.mxu0 0.0
    %103 = vmatprep.subr.mxu0 0.0
    %104 = vmatpush1.msra.mxu0 0.0
    %105 = vmatprep.subr.mxu0 0.0
    %106 = vmatpush1.msra.mxu0 0.0
    %107 = vmatprep.subr.mxu0 0.0
    %108 = vmatpush1.msra.mxu0 0.0
    %109 = vmatprep.subr.mxu0 0.0
    %110 = vmatpush1.msra.mxu0 0.0
    %111 = vmatprep.subr.mxu0 0.0
    %112 = vmatpush1.msra.mxu0 0.0
    %113 = vmatprep.subr.mxu0 0.0
    %114 = vmatpush1.msra.mxu0 0.0
    %115 = vmatprep.subr.mxu0 0.0
    %116 = vmatpush1.msra.mxu0 0.0
    %117 = vmatprep.subr.mxu0 0.0
    %118 = vmatpush1.msra.mxu0 0.0
    %119 = vmatprep.subr.mxu0 0.0
    %120 = vmatpush1.msra.mxu0 0.0
    %121 = vmatprep.subr.mxu0 0.0
    %122 = vmatpush1.msra.mxu0 0.0
    %123 = vmatprep.subr.mxu0 0.0
    %124 = vmatpush1.msra.mxu0 0.0
    %125 = vmatprep.subr.mxu0 0.0
    %126 = vmatpush1.msra.mxu0 0.0
    %127 = vmatprep.subr.mxu0 0.0
    %128 = vmatpush1.msra.mxu0 0.0
    %129 = vmatprep.mubr.f32.mxu0 0.0
    %130 = vmatmul.mubr.f32.gmra.mrb[0].mxu0 %v41
    %v131 = vpop.f32.mrb[0].mxu0
    %v132 = vadd.f32 %v63, %v131
    %v133 = vpop.f32.mrb[0].mxu0
    %134 = vdwg.mxu0
    %135 = vst [vmem:[#allocation7] sm:$0xff] %v132
    // Predicated region
    $region22: #{tpu_custom_call.1} parent=1 // pred_check
      _
    $region23: #{tpu_custom_call.1} parent=1 // pred_check_branch
      %137 = sbr.rel (0) target = $region25
    $region24: #{tpu_custom_call.1} parent=1 // pred_region
      %s139 = ssub.s32 128, 128
      %140 = vsyncadd [#allocation4], %s139
      %s142 = sshll.u32 [#allocation7], 4
      %s143 = int_to_ptr.vmem [resolvable:$true] %s142
      %145 = dma.vmem_to_hbm [thread:$0]  %s143, 128, %s3, [#allocation4]
    $region25: #{tpu_custom_call.1} parent=1 // pred_fallthru
      _
    // Predicated region
    $region26: #{tpu_custom_call.1} parent=1 // pred_check
      _
    $region27: #{tpu_custom_call.1} parent=1 // pred_check_branch
      %147 = sbr.rel (0) target = $region29
    $region28: #{tpu_custom_call.1} parent=1 // pred_region
      %148 = dma.done [#allocation4], 128
    $region29: #{tpu_custom_call.1} parent=1 // pred_fallthru
      _
    %149 = vsyncpa [#allocation3], 1
    %150 = vsyncpa [#allocation6], 1
    %151 = vsyncpa [#allocation4], 1

</llo_original>
